<compile_context>
chip_gen: v5e
topology: v5e:2x2
jax: 0.10.0
libtpu: 0.0.40
codegen_flags: <defaults>
</compile_context>

<pallas_src>
import functools

import jax
import jax.numpy as jnp
from jax.experimental import pallas as pl
from jax.experimental.pallas import tpu as pltpu

IN_DIM = 80  # fixed by the PyTorch module: nn.Linear(80, mid) / nn.Linear(mid, 80)


def _round_up(a, m):
    return (a + m - 1) // m * m


# ----------------------------------------------------------------------------
# Kernel
# ----------------------------------------------------------------------------
def vae_kernel(
    xin_ref,                   # (TB, 80 + latent)  packed [x | eps]
    w_e1_ref, b_e1_ref,        # encoder Linear(80 -> mid)
    w_e2_ref, b_e2_ref,        # encoder Linear(mid -> latent)
    w_head_ref, b_head_ref,    # fused [mu | log_var] Linear(latent -> 2*latent)
    w_d1_ref, b_d1_ref,        # decoder Linear(latent -> mid)
    w_d2_ref, b_d2_ref,        # decoder Linear(mid -> 80)
    out_ref,                   # (TB, round_up(80 + 3*latent, 128)) packed [dec|enc|mu|lv|0pad]
    *,
    latent,
    out_used,
):
    # ---- single packed input slab: lanes [0:80] = x, [80:80+latent] = eps ----
    x = xin_ref[:, 0:IN_DIM]
    eps = xin_ref[:, IN_DIM:IN_DIM + latent]

    # ---- encoder: Linear -> ReLU -> Linear -> ReLU ----
    h1 = jnp.dot(x, w_e1_ref[...], preferred_element_type=jnp.float32) + b_e1_ref[...]
    h1 = jnp.maximum(h1, 0.0)
    enc = jnp.dot(h1, w_e2_ref[...], preferred_element_type=jnp.float32) + b_e2_ref[...]
    enc = jnp.maximum(enc, 0.0)

    # ---- fused mu / log_var head: one (latent, 2*latent) matmul ----
    head = jnp.dot(enc, w_head_ref[...], preferred_element_type=jnp.float32) + b_head_ref[...]
    mu = head[:, :latent]
    lv = head[:, latent:]

    # ---- reparameterize: z = mu + eps * exp(0.5 * log_var) ----
    z = mu + eps * jnp.exp(0.5 * lv)

    # ---- decoder: Linear -> ReLU -> Linear -> Sigmoid ----
    h2 = jnp.dot(z, w_d1_ref[...], preferred_element_type=jnp.float32) + b_d1_ref[...]
    h2 = jnp.maximum(h2, 0.0)
    dec = jnp.dot(h2, w_d2_ref[...], preferred_element_type=jnp.float32) + b_d2_ref[...]
    dec = jax.nn.sigmoid(dec)

    # ---- direct static lane-slice stores (no concat temporary) ----
    dt = out_ref.dtype
    out_ref[:, 0:IN_DIM] = dec.astype(dt)
    out_ref[:, IN_DIM:IN_DIM + latent] = enc.astype(dt)
    out_ref[:, IN_DIM + latent:IN_DIM + 2 * latent] = mu.astype(dt)
    out_ref[:, IN_DIM + 2 * latent:IN_DIM + 3 * latent] = lv.astype(dt)
    if out_used < out_ref.shape[1]:
        # Zero the lane padding (only happens when 80 + 3*latent is not a
        # multiple of 128) so HBM never receives uninitialized garbage.
        out_ref[:, out_used:] = jnp.zeros(
            (out_ref.shape[0], out_ref.shape[1] - out_used), dt)


# ----------------------------------------------------------------------------
# Wrapper
# ----------------------------------------------------------------------------
def _choose_batch_tile(B, block_batch, min_grid_steps=8):
    """Largest sublane-aligned batch tile, but keep >= min_grid_steps steps
    when B is large so megacore (v7x) sharding + double-buffering stay full."""
    if B <= block_batch:
        return max(_round_up(B, 8), 8)
    tb = min(block_batch, _round_up(pl.cdiv(B, min_grid_steps), 8))
    return max(tb, 8)


def _vmem_limit_bytes(tb, in_w, out_w, weight_bytes):
    """Scoped-VMEM request covering double-buffered batch slabs + resident
    weights + a generous activation-temporary allowance.  Floor 32 MiB (raises
    v5e's 16 MiB default), cap 64 MiB (never exceeds v7x physical VMEM)."""
    slab = tb * (_round_up(in_w, 128) + _round_up(out_w, 128)) * 4
    act = tb * 512 * 4
    est = 2 * slab + 2 * weight_bytes + act + (4 << 20)
    return int(min(max(est, 32 << 20), 64 << 20))


def vae_forward_packed(x, params, eps, *, block_batch=4096):
    """Runs the fused VAE forward.  Returns a packed (B, round_up(80+3L,128))
    slab laid out as [decoded(80) | encoded(L) | mu(L) | log_var(L) | 0pad].

    Prefer consuming this slab directly (or splitting it inside a jit region
    where XLA fuses the slices into consumers) to avoid extra HBM passes.
    """
    B, d = x.shape
    assert d == IN_DIM
    mid = params["w_e1"].shape[1]
    latent = params["w_mu"].shape[1]
    assert eps.shape == (B, latent)

    # Fuse mu / log_var heads into one weight/bias (wrapper-side, one-time).
    w_head = jnp.concatenate([params["w_mu"], params["w_lv"]], axis=1)   # (L, 2L)
    b_head = jnp.concatenate([params["b_mu"], params["b_lv"]], axis=1)   # (1, 2L)

    # Single packed input slab [x | eps] -> one batch DMA stream.
    xin = jnp.concatenate([x.astype(jnp.float32), eps.astype(jnp.float32)], axis=1)
    in_w = IN_DIM + latent

    out_used = IN_DIM + 3 * latent
    out_w = _round_up(out_used, 128)   # lane-dense, unmasked output store stream

    tb = _choose_batch_tile(B, block_batch)
    b_pad = _round_up(B, tb)
    if b_pad != B:
        xin = jnp.pad(xin, ((0, b_pad - B), (0, 0)))
    grid = (b_pad // tb,)

    def batch_spec(width):
        return pl.BlockSpec((tb, width), lambda i: (i, 0))

    def resident_spec(shape):
        # Whole array, same block every grid step -> stays VMEM-resident.
        return pl.BlockSpec(shape, lambda i: (0, 0))

    weights = (
        params["w_e1"], params["b_e1"],
        params["w_e2"], params["b_e2"],
        w_head, b_head,
        params["w_d1"], params["b_d1"],
        params["w_d2"], params["b_d2"],
    )
    weight_bytes = sum(int(w.size) * 4 for w in weights)

    flops = 2 * b_pad * (IN_DIM * mid + mid * latent + latent * (2 * latent)
                         + latent * mid + mid * IN_DIM)
    transcendentals = b_pad * (latent + IN_DIM)          # exp + sigmoid
    bytes_accessed = b_pad * (in_w + out_w) * 4 + weight_bytes

    in_specs = [batch_spec(in_w)] + [resident_spec(w.shape) for w in weights]
    out_specs = batch_spec(out_w)

    packed = pl.pallas_call(
        functools.partial(vae_kernel, latent=latent, out_used=out_used),
        out_shape=jax.ShapeDtypeStruct((b_pad, out_w), jnp.float32),
        grid=grid,
        in_specs=in_specs,
        out_specs=out_specs,
        compiler_params=pltpu.CompilerParams(
            dimension_semantics=("parallel",),
            vmem_limit_bytes=_vmem_limit_bytes(tb, in_w, out_w, weight_bytes),
        ),
        cost_estimate=pl.CostEstimate(
            flops=int(flops),
            transcendentals=int(transcendentals),
            bytes_accessed=int(bytes_accessed),
        ),
    )(xin, *weights)

    return packed[:B, :]   # contiguous batch-prefix slice only (cheap)


def split_vae_outputs(packed, latent):
    """Thin split helper (fuses into consumers under jit). Matches VAE.forward
    ordering: (encoded, decoded, mu, log_var)."""
    decoded = packed[:, :IN_DIM]
    encoded = packed[:, IN_DIM:IN_DIM + latent]
    mu = packed[:, IN_DIM + latent:IN_DIM + 2 * latent]
    log_var = packed[:, IN_DIM + 2 * latent:IN_DIM + 3 * latent]
    return encoded, decoded, mu, log_var


def vae_forward(x, params, eps, *, block_batch=4096):
    latent = params["w_mu"].shape[1]
    packed = vae_forward_packed(x, params, eps, block_batch=block_batch)
    return split_vae_outputs(packed, latent)


# ----------------------------------------------------------------------------
# Params / reference
# ----------------------------------------------------------------------------
def init_params(key, mid_layer, latent_dim):
    """nn.Linear-style init (uniform +/- 1/sqrt(fan_in)).  Weights stored
    pre-transposed as (in_features, out_features); biases as (1, out)."""
    def linear(k, fan_in, fan_out):
        kw, kb = jax.random.split(k)
        bound = 1.0 / jnp.sqrt(fan_in)
        w = jax.random.uniform(kw, (fan_in, fan_out), jnp.float32, -bound, bound)
        b = jax.random.uniform(kb, (1, fan_out), jnp.float32, -bound, bound)
        return w, b

    keys = jax.random.split(key, 6)
    p = {}
    p["w_e1"], p["b_e1"] = linear(keys[0], IN_DIM, mid_layer)
    p["w_e2"], p["b_e2"] = linear(keys[1], mid_layer, latent_dim)
    p["w_mu"], p["b_mu"] = linear(keys[2], latent_dim, latent_dim)
    p["w_lv"], p["b_lv"] = linear(keys[3], latent_dim, latent_dim)
    p["w_d1"], p["b_d1"] = linear(keys[4], latent_dim, mid_layer)
    p["w_d2"], p["b_d2"] = linear(keys[5], mid_layer, IN_DIM)
    return p


def ref_forward(x, p, eps):
    h1 = jnp.maximum(x @ p["w_e1"] + p["b_e1"], 0.0)
    enc = jnp.maximum(h1 @ p["w_e2"] + p["b_e2"], 0.0)
    mu = enc @ p["w_mu"] + p["b_mu"]
    lv = enc @ p["w_lv"] + p["b_lv"]
    z = mu + eps * jnp.exp(0.5 * lv)
    h2 = jnp.maximum(z @ p["w_d1"] + p["b_d1"], 0.0)
    dec = jax.nn.sigmoid(h2 @ p["w_d2"] + p["b_d2"])
    return enc, dec, mu, lv


# ----------------------------------------------------------------------------
# Self-test
# ----------------------------------------------------------------------------
if __name__ == "__main__":
    mid_layer = 32
    latent_dim = 16

    root = jax.random.PRNGKey(0)
    k_params, k_x, k_eps, k_x2, k_eps2 = jax.random.split(root, 5)
    params = init_params(k_params, mid_layer, latent_dim)

    # --- small single-tile case (batch = 8) ---
    batch = 8
    x = jax.random.normal(k_x, (batch, IN_DIM), jnp.float32)
    eps = jax.random.normal(k_eps, (batch, latent_dim), jnp.float32)  # torch.randn_like(sd)

    encoded, decoded, mu, log_var = vae_forward(x, params, eps)
    jax.block_until_ready((encoded, decoded, mu, log_var))

    r_enc, r_dec, r_mu, r_lv = ref_forward(x, params, eps)
    assert jnp.allclose(encoded, r_enc, atol=1e-5)
    assert jnp.allclose(decoded, r_dec, atol=1e-5)
    assert jnp.allclose(mu, r_mu, atol=1e-5)
    assert jnp.allclose(log_var, r_lv, atol=1e-5)

    # --- multi-step grid case (3 grid steps, resident weights, batch padding) ---
    batch2 = 20
    x2 = jax.random.normal(k_x2, (batch2, IN_DIM), jnp.float32)
    eps2 = jax.random.normal(k_eps2, (batch2, latent_dim), jnp.float32)
    enc2, dec2, mu2, lv2 = vae_forward(x2, params, eps2, block_batch=8)
    jax.block_until_ready((enc2, dec2, mu2, lv2))

    r_enc2, r_dec2, r_mu2, r_lv2 = ref_forward(x2, params, eps2)
    assert jnp.allclose(enc2, r_enc2, atol=1e-5)
    assert jnp.allclose(dec2, r_dec2, atol=1e-5)
    assert jnp.allclose(mu2, r_mu2, atol=1e-5)
    assert jnp.allclose(lv2, r_lv2, atol=1e-5)

    print("KERNEL_OK")
</pallas_src>

<mosaic_0001>
module attributes {stable_mosaic.version = 11 : i64} {
  func.func @vae_kernel(%arg0: i32, %arg1: memref<8x96xf32, #tpu.memory_space<vmem>>, %arg2: memref<80x32xf32, #tpu.memory_space<vmem>>, %arg3: memref<1x32xf32, #tpu.memory_space<vmem>>, %arg4: memref<32x16xf32, #tpu.memory_space<vmem>>, %arg5: memref<1x16xf32, #tpu.memory_space<vmem>>, %arg6: memref<16x32xf32, #tpu.memory_space<vmem>>, %arg7: memref<1x32xf32, #tpu.memory_space<vmem>>, %arg8: memref<16x32xf32, #tpu.memory_space<vmem>>, %arg9: memref<1x32xf32, #tpu.memory_space<vmem>>, %arg10: memref<32x80xf32, #tpu.memory_space<vmem>>, %arg11: memref<1x80xf32, #tpu.memory_space<vmem>>, %arg12: memref<8x128xf32, #tpu.memory_space<vmem>>) attributes {dimension_semantics = [#tpu.dimension_semantics<parallel>], iteration_bounds = array<i64: 1>, scalar_prefetch = 0 : i64, scratch_operands = 0 : i64, tpu.core_type = #tpu.core_type<tc>, window_params = [{transform_indices = @transform_0, window_bounds = array<i64: 8, 96>}, {pipeline_mode = #tpu.pipeline_mode<synchronous>, transform_indices = @transform_1, window_bounds = array<i64: 80, 32>}, {pipeline_mode = #tpu.pipeline_mode<synchronous>, transform_indices = @transform_2, window_bounds = array<i64: 1, 32>}, {pipeline_mode = #tpu.pipeline_mode<synchronous>, transform_indices = @transform_3, window_bounds = array<i64: 32, 16>}, {pipeline_mode = #tpu.pipeline_mode<synchronous>, transform_indices = @transform_4, window_bounds = array<i64: 1, 16>}, {pipeline_mode = #tpu.pipeline_mode<synchronous>, transform_indices = @transform_5, window_bounds = array<i64: 16, 32>}, {pipeline_mode = #tpu.pipeline_mode<synchronous>, transform_indices = @transform_6, window_bounds = array<i64: 1, 32>}, {pipeline_mode = #tpu.pipeline_mode<synchronous>, transform_indices = @transform_7, window_bounds = array<i64: 16, 32>}, {pipeline_mode = #tpu.pipeline_mode<synchronous>, transform_indices = @transform_8, window_bounds = array<i64: 1, 32>}, {pipeline_mode = #tpu.pipeline_mode<synchronous>, transform_indices = @transform_9, window_bounds = array<i64: 32, 80>}, {pipeline_mode = #tpu.pipeline_mode<synchronous>, transform_indices = @transform_10, window_bounds = array<i64: 1, 80>}, {transform_indices = @transform_11, window_bounds = array<i64: 8, 128>}]} {
    %c0 = arith.constant 0 : index
    %c0_0 = arith.constant 0 : index
    %0 = vector.load %arg1[%c0, %c0_0] : memref<8x96xf32, #tpu.memory_space<vmem>>, vector<8x80xf32>
    %c0_1 = arith.constant 0 : index
    %c80 = arith.constant 80 : index
    %1 = vector.load %arg1[%c0_1, %c80] : memref<8x96xf32, #tpu.memory_space<vmem>>, vector<8x16xf32>
    %c0_2 = arith.constant 0 : index
    %c0_3 = arith.constant 0 : index
    %2 = vector.load %arg2[%c0_2, %c0_3] : memref<80x32xf32, #tpu.memory_space<vmem>>, vector<80x32xf32>
    %cst = arith.constant dense<0.000000e+00> : vector<8x32xf32>
    %3 = tpu.matmul %0, %2, %cst {dimension_numbers = #tpu.dot_dimension_numbers<[1], [0], [0], [1], [0, 0, 1, 1], [], []>} : vector<8x80xf32>, vector<80x32xf32>, vector<8x32xf32> -> vector<8x32xf32>
    %c0_4 = arith.constant 0 : index
    %c0_5 = arith.constant 0 : index
    %4 = vector.load %arg3[%c0_4, %c0_5] : memref<1x32xf32, #tpu.memory_space<vmem>>, vector<1x32xf32>
    %5 = vector.broadcast %4 : vector<1x32xf32> to vector<8x32xf32>
    %6 = arith.addf %3, %5 : vector<8x32xf32>
    %cst_6 = arith.constant 0.000000e+00 : f32
    %7 = vector.broadcast %cst_6 : f32 to vector<8x32xf32>
    %8 = arith.maximumf %6, %7 : vector<8x32xf32>
    %c0_7 = arith.constant 0 : index
    %c0_8 = arith.constant 0 : index
    %9 = vector.load %arg4[%c0_7, %c0_8] : memref<32x16xf32, #tpu.memory_space<vmem>>, vector<32x16xf32>
    %cst_9 = arith.constant dense<0.000000e+00> : vector<8x16xf32>
    %10 = tpu.matmul %8, %9, %cst_9 {dimension_numbers = #tpu.dot_dimension_numbers<[1], [0], [0], [1], [0, 0, 1, 1], [], []>} : vector<8x32xf32>, vector<32x16xf32>, vector<8x16xf32> -> vector<8x16xf32>
    %c0_10 = arith.constant 0 : index
    %c0_11 = arith.constant 0 : index
    %11 = vector.load %arg5[%c0_10, %c0_11] : memref<1x16xf32, #tpu.memory_space<vmem>>, vector<1x16xf32>
    %12 = vector.broadcast %11 : vector<1x16xf32> to vector<8x16xf32>
    %13 = arith.addf %10, %12 : vector<8x16xf32>
    %cst_12 = arith.constant 0.000000e+00 : f32
    %14 = vector.broadcast %cst_12 : f32 to vector<8x16xf32>
    %15 = arith.maximumf %13, %14 : vector<8x16xf32>
    %c0_13 = arith.constant 0 : index
    %c0_14 = arith.constant 0 : index
    %16 = vector.load %arg6[%c0_13, %c0_14] : memref<16x32xf32, #tpu.memory_space<vmem>>, vector<16x32xf32>
    %cst_15 = arith.constant dense<0.000000e+00> : vector<8x32xf32>
    %17 = tpu.matmul %15, %16, %cst_15 {dimension_numbers = #tpu.dot_dimension_numbers<[1], [0], [0], [1], [0, 0, 1, 1], [], []>} : vector<8x16xf32>, vector<16x32xf32>, vector<8x32xf32> -> vector<8x32xf32>
    %c0_16 = arith.constant 0 : index
    %c0_17 = arith.constant 0 : index
    %18 = vector.load %arg7[%c0_16, %c0_17] : memref<1x32xf32, #tpu.memory_space<vmem>>, vector<1x32xf32>
    %19 = vector.broadcast %18 : vector<1x32xf32> to vector<8x32xf32>
    %20 = arith.addf %17, %19 : vector<8x32xf32>
    %21 = vector.extract_strided_slice %20 {offsets = [0, 0], sizes = [8, 16], strides = [1, 1]} : vector<8x32xf32> to vector<8x16xf32>
    %22 = vector.extract_strided_slice %20 {offsets = [0, 16], sizes = [8, 16], strides = [1, 1]} : vector<8x32xf32> to vector<8x16xf32>
    %cst_18 = arith.constant 5.000000e-01 : f32
    %23 = vector.broadcast %cst_18 : f32 to vector<8x16xf32>
    %24 = arith.mulf %23, %22 : vector<8x16xf32>
    %25 = math.exp %24 : vector<8x16xf32>
    %26 = arith.mulf %1, %25 : vector<8x16xf32>
    %27 = arith.addf %21, %26 : vector<8x16xf32>
    %c0_19 = arith.constant 0 : index
    %c0_20 = arith.constant 0 : index
    %28 = vector.load %arg8[%c0_19, %c0_20] : memref<16x32xf32, #tpu.memory_space<vmem>>, vector<16x32xf32>
    %cst_21 = arith.constant dense<0.000000e+00> : vector<8x32xf32>
    %29 = tpu.matmul %27, %28, %cst_21 {dimension_numbers = #tpu.dot_dimension_numbers<[1], [0], [0], [1], [0, 0, 1, 1], [], []>} : vector<8x16xf32>, vector<16x32xf32>, vector<8x32xf32> -> vector<8x32xf32>
    %c0_22 = arith.constant 0 : index
    %c0_23 = arith.constant 0 : index
    %30 = vector.load %arg9[%c0_22, %c0_23] : memref<1x32xf32, #tpu.memory_space<vmem>>, vector<1x32xf32>
    %31 = vector.broadcast %30 : vector<1x32xf32> to vector<8x32xf32>
    %32 = arith.addf %29, %31 : vector<8x32xf32>
    %cst_24 = arith.constant 0.000000e+00 : f32
    %33 = vector.broadcast %cst_24 : f32 to vector<8x32xf32>
    %34 = arith.maximumf %32, %33 : vector<8x32xf32>
    %c0_25 = arith.constant 0 : index
    %c0_26 = arith.constant 0 : index
    %35 = vector.load %arg10[%c0_25, %c0_26] : memref<32x80xf32, #tpu.memory_space<vmem>>, vector<32x80xf32>
    %cst_27 = arith.constant dense<0.000000e+00> : vector<8x80xf32>
    %36 = tpu.matmul %34, %35, %cst_27 {dimension_numbers = #tpu.dot_dimension_numbers<[1], [0], [0], [1], [0, 0, 1, 1], [], []>} : vector<8x32xf32>, vector<32x80xf32>, vector<8x80xf32> -> vector<8x80xf32>
    %c0_28 = arith.constant 0 : index
    %c0_29 = arith.constant 0 : index
    %37 = vector.load %arg11[%c0_28, %c0_29] : memref<1x80xf32, #tpu.memory_space<vmem>>, vector<1x80xf32>
    %38 = vector.broadcast %37 : vector<1x80xf32> to vector<8x80xf32>
    %39 = arith.addf %36, %38 : vector<8x80xf32>
    %40 = arith.negf %39 : vector<8x80xf32>
    %41 = math.exp %40 : vector<8x80xf32>
    %cst_30 = arith.constant 1.000000e+00 : f32
    %42 = vector.broadcast %cst_30 : f32 to vector<8x80xf32>
    %43 = arith.addf %42, %41 : vector<8x80xf32>
    %44 = arith.divf %42, %43 : vector<8x80xf32>
    %c0_31 = arith.constant 0 : index
    %c0_32 = arith.constant 0 : index
    %45 = vector.load %arg12[%c0_31, %c0_32] : memref<8x128xf32, #tpu.memory_space<vmem>>, vector<8x80xf32>
    tpu.vector_store %arg12[%c0_31, %c0_32], %44 {strides = array<i32>} : memref<8x128xf32, #tpu.memory_space<vmem>>, vector<8x80xf32>,
    %c0_33 = arith.constant 0 : index
    %c80_34 = arith.constant 80 : index
    %46 = vector.load %arg12[%c0_33, %c80_34] : memref<8x128xf32, #tpu.memory_space<vmem>>, vector<8x16xf32>
    tpu.vector_store %arg12[%c0_33, %c80_34], %15 {strides = array<i32>} : memref<8x128xf32, #tpu.memory_space<vmem>>, vector<8x16xf32>,
    %c0_35 = arith.constant 0 : index
    %c96 = arith.constant 96 : index
    %47 = vector.load %arg12[%c0_35, %c96] : memref<8x128xf32, #tpu.memory_space<vmem>>, vector<8x16xf32>
    tpu.vector_store %arg12[%c0_35, %c96], %21 {strides = array<i32>} : memref<8x128xf32, #tpu.memory_space<vmem>>, vector<8x16xf32>,
    %c0_36 = arith.constant 0 : index
    %c112 = arith.constant 112 : index
    %48 = vector.load %arg12[%c0_36, %c112] : memref<8x128xf32, #tpu.memory_space<vmem>>, vector<8x16xf32>
    tpu.vector_store %arg12[%c0_36, %c112], %22 {strides = array<i32>} : memref<8x128xf32, #tpu.memory_space<vmem>>, vector<8x16xf32>,
    return
  }
  func.func @transform_0(%arg0: i32) -> (i32, i32) {
    %c0_i32 = arith.constant 0 : i32
    %c0_i32_0 = arith.constant 0 : i32
    return %arg0, %c0_i32 : i32, i32
  }
  func.func @transform_1(%arg0: i32) -> (i32, i32) {
    %c0_i32 = arith.constant 0 : i32
    %c0_i32_0 = arith.constant 0 : i32
    %c0_i32_1 = arith.constant 0 : i32
    return %c0_i32, %c0_i32_0 : i32, i32
  }
  func.func @transform_2(%arg0: i32) -> (i32, i32) {
    %c0_i32 = arith.constant 0 : i32
    %c0_i32_0 = arith.constant 0 : i32
    %c0_i32_1 = arith.constant 0 : i32
    return %c0_i32, %c0_i32_0 : i32, i32
  }
  func.func @transform_3(%arg0: i32) -> (i32, i32) {
    %c0_i32 = arith.constant 0 : i32
    %c0_i32_0 = arith.constant 0 : i32
    %c0_i32_1 = arith.constant 0 : i32
    return %c0_i32, %c0_i32_0 : i32, i32
  }
  func.func @transform_4(%arg0: i32) -> (i32, i32) {
    %c0_i32 = arith.constant 0 : i32
    %c0_i32_0 = arith.constant 0 : i32
    %c0_i32_1 = arith.constant 0 : i32
    return %c0_i32, %c0_i32_0 : i32, i32
  }
  func.func @transform_5(%arg0: i32) -> (i32, i32) {
    %c0_i32 = arith.constant 0 : i32
    %c0_i32_0 = arith.constant 0 : i32
    %c0_i32_1 = arith.constant 0 : i32
    return %c0_i32, %c0_i32_0 : i32, i32
  }
  func.func @transform_6(%arg0: i32) -> (i32, i32) {
    %c0_i32 = arith.constant 0 : i32
    %c0_i32_0 = arith.constant 0 : i32
    %c0_i32_1 = arith.constant 0 : i32
    return %c0_i32, %c0_i32_0 : i32, i32
  }
  func.func @transform_7(%arg0: i32) -> (i32, i32) {
    %c0_i32 = arith.constant 0 : i32
    %c0_i32_0 = arith.constant 0 : i32
    %c0_i32_1 = arith.constant 0 : i32
    return %c0_i32, %c0_i32_0 : i32, i32
  }
  func.func @transform_8(%arg0: i32) -> (i32, i32) {
    %c0_i32 = arith.constant 0 : i32
    %c0_i32_0 = arith.constant 0 : i32
    %c0_i32_1 = arith.constant 0 : i32
    return %c0_i32, %c0_i32_0 : i32, i32
  }
  func.func @transform_9(%arg0: i32) -> (i32, i32) {
    %c0_i32 = arith.constant 0 : i32
    %c0_i32_0 = arith.constant 0 : i32
    %c0_i32_1 = arith.constant 0 : i32
    return %c0_i32, %c0_i32_0 : i32, i32
  }
  func.func @transform_10(%arg0: i32) -> (i32, i32) {
    %c0_i32 = arith.constant 0 : i32
    %c0_i32_0 = arith.constant 0 : i32
    %c0_i32_1 = arith.constant 0 : i32
    return %c0_i32, %c0_i32_0 : i32, i32
  }
  func.func @transform_11(%arg0: i32) -> (i32, i32) {
    %c0_i32 = arith.constant 0 : i32
    %c0_i32_0 = arith.constant 0 : i32
    return %arg0, %c0_i32 : i32, i32
  }
}

</mosaic_0001>

<llo_original>
// kernel: tpu_custom_call.1
$region0: #{tpu_custom_call.1}
  #allocation0 [shape = 'u32[]', space=smem, size = 0x4, offset = 0x4, fixed_abs, tag = 'smem constant byte address 0x4 - core index']
  #allocation1 [shape = 'u32[72,128]{1,0:T(1,128)}', space=vmem, size = 0x9000, scoped, tag = 'internal scratch']
  %s0 = inlined_call_operand.vmem [shape: f32[8,96], index: 0, kind: input, shape index: {}]
  %s1 = inlined_call_operand.vmem [shape: f32[80,32], index: 1, kind: input, shape index: {}]
  %s2 = inlined_call_operand.vmem [shape: f32[1,32], index: 2, kind: input, shape index: {}]
  %s3 = inlined_call_operand.vmem [shape: f32[32,16], index: 3, kind: input, shape index: {}]
  %s4 = inlined_call_operand.vmem [shape: f32[1,16], index: 4, kind: input, shape index: {}]
  %s5 = inlined_call_operand.vmem [shape: f32[16,32], index: 5, kind: input, shape index: {}]
  %s6 = inlined_call_operand.vmem [shape: f32[1,32], index: 6, kind: input, shape index: {}]
  %s7 = inlined_call_operand.vmem [shape: f32[16,32], index: 7, kind: input, shape index: {}]
  %s8 = inlined_call_operand.vmem [shape: f32[1,32], index: 8, kind: input, shape index: {}]
  %s9 = inlined_call_operand.vmem [shape: f32[32,80], index: 9, kind: input, shape index: {}]
  %s10 = inlined_call_operand.vmem [shape: f32[1,80], index: 10, kind: input, shape index: {}]
  %s11 = inlined_call_operand.hbm [shape: f32[8,128], index: 11, kind: output, shape index: {}]
  %s12 = sld [smem:[#allocation0]]
  $region54: #{tpu_custom_call.1} parent=0
    _
  %s14 = ssub.s32 1, %s12
  %s15 = scalar_select 0, %s14, %s12
  $region1: #{tpu_custom_call.1} parent=0
    #allocation2 [shape = 'u8[4096]{0}', space=vmem, size = 0x1000, scoped, tag = 'output window, operand 0, single buffered']
    #allocation3 [shape = 's32[1]{0}', space=sflag, size = 0x4, scoped, tag = 'scoped memory for tpu_custom_call.1']
    %16 = vsyncpa [#allocation3], 0
    // Predicated region
    $region2: #{tpu_custom_call.1} parent=1 // pred_check
      _
    $region3: #{tpu_custom_call.1} parent=1 // pred_check_branch
      %18 = sbr.rel (0) target = $region5
    $region4: #{tpu_custom_call.1} parent=1 // pred_region
      _
    $region5: #{tpu_custom_call.1} parent=1 // pred_fallthru
      _
    // Predicated region
    $region6: #{tpu_custom_call.1} parent=1 // pred_check
      _
    $region7: #{tpu_custom_call.1} parent=1 // pred_check_branch
      %20 = sbr.rel (0) target = $region9
    $region8: #{tpu_custom_call.1} parent=1 // pred_region
      _
    $region9: #{tpu_custom_call.1} parent=1 // pred_fallthru
      _
    // Predicated region
    $region10: #{tpu_custom_call.1} parent=1 // pred_check
      _
    $region11: #{tpu_custom_call.1} parent=1 // pred_check_branch
      %22 = sbr.rel (0) target = $region13
    $region12: #{tpu_custom_call.1} parent=1 // pred_region
      _
    $region13: #{tpu_custom_call.1} parent=1 // pred_fallthru
      _
    // Predicated region
    $region14: #{tpu_custom_call.1} parent=1 // pred_check
      _
    $region15: #{tpu_custom_call.1} parent=1 // pred_check_branch
      %24 = sbr.rel (0) target = $region17
    $region16: #{tpu_custom_call.1} parent=1 // pred_region
      _
    $region17: #{tpu_custom_call.1} parent=1 // pred_fallthru
      _
    // Predicated region
    $region18: #{tpu_custom_call.1} parent=1 // pred_check
      _
    $region19: #{tpu_custom_call.1} parent=1 // pred_check_branch
      %26 = sbr.rel (0) target = $region21
    $region20: #{tpu_custom_call.1} parent=1 // pred_region
      _
    $region21: #{tpu_custom_call.1} parent=1 // pred_fallthru
      _
    // Predicated region
    $region22: #{tpu_custom_call.1} parent=1 // pred_check
      _
    $region23: #{tpu_custom_call.1} parent=1 // pred_check_branch
      %28 = sbr.rel (0) target = $region25
    $region24: #{tpu_custom_call.1} parent=1 // pred_region
      _
    $region25: #{tpu_custom_call.1} parent=1 // pred_fallthru
      _
    // Predicated region
    $region26: #{tpu_custom_call.1} parent=1 // pred_check
      _
    $region27: #{tpu_custom_call.1} parent=1 // pred_check_branch
      %30 = sbr.rel (0) target = $region29
    $region28: #{tpu_custom_call.1} parent=1 // pred_region
      _
    $region29: #{tpu_custom_call.1} parent=1 // pred_fallthru
      _
    // Predicated region
    $region30: #{tpu_custom_call.1} parent=1 // pred_check
      _
    $region31: #{tpu_custom_call.1} parent=1 // pred_check_branch
      %32 = sbr.rel (0) target = $region33
    $region32: #{tpu_custom_call.1} parent=1 // pred_region
      _
    $region33: #{tpu_custom_call.1} parent=1 // pred_fallthru
      _
    // Predicated region
    $region34: #{tpu_custom_call.1} parent=1 // pred_check
      _
    $region35: #{tpu_custom_call.1} parent=1 // pred_check_branch
      %34 = sbr.rel (0) target = $region37
    $region36: #{tpu_custom_call.1} parent=1 // pred_region
      _
    $region37: #{tpu_custom_call.1} parent=1 // pred_fallthru
      _
    // Predicated region
    $region38: #{tpu_custom_call.1} parent=1 // pred_check
      _
    $region39: #{tpu_custom_call.1} parent=1 // pred_check_branch
      %36 = sbr.rel (0) target = $region41
    $region40: #{tpu_custom_call.1} parent=1 // pred_region
      _
    $region41: #{tpu_custom_call.1} parent=1 // pred_fallthru
      _
    // Predicated region
    $region42: #{tpu_custom_call.1} parent=1 // pred_check
      _
    $region43: #{tpu_custom_call.1} parent=1 // pred_check_branch
      %38 = sbr.rel (0) target = $region45
    $region44: #{tpu_custom_call.1} parent=1 // pred_region
      _
    $region45: #{tpu_custom_call.1} parent=1 // pred_fallthru
      _
    %v39 = vld [vmem:[%s0] sm:$0xff]
    %v40 = vld [vmem:[%s1] sm:$0xff]
    %v41 = vld [vmem:[%s1 + $0x8] sm:$0xff]
    %v42 = vld [vmem:[%s1 + $0x10] sm:$0xff]
    %v43 = vld [vmem:[%s1 + $0x18] sm:$0xff]
    %v44 = vld [vmem:[%s1 + $0x20] sm:$0xff]
    %v45 = vld [vmem:[%s1 + $0x28] sm:$0xff]
    %v46 = vld [vmem:[%s1 + $0x30] sm:$0xff]
    %v47 = vld [vmem:[%s1 + $0x38] sm:$0xff]
    %v48 = vld [vmem:[%s1 + $0x40] sm:$0xff]
    %v49 = vld [vmem:[%s1 + $0x48] sm:$0xff]
    %v50 = vld [vmem:[%s2] sm:$0x1]
    %v52 = vperm.slane %v50, 0
    %vm54 = vcmask 654336
    %v56 = vsel %vm54, %v39, 0
    %58 = vmatpush.msra.mxu0 0.0
    %59 = vmatpush.msra.mxu0 0.0
    %60 = vmatpush.msra.mxu0 0.0
    %61 = vmatpush.msra.mxu0 0.0
    %62 = vmatpush.msra.mxu0 0.0
    %63 = vmatpush.msra.mxu0 0.0
    %64 = vmatpush.msra.mxu0 %v49
    %65 = vmatpush.msra.mxu0 %v48
    %66 = vmatpush.msra.mxu0 %v47
    %67 = vmatpush.msra.mxu0 %v46
    %68 = vmatpush.msra.mxu0 %v45
    %69 = vmatpush.msra.mxu0 %v44
    %70 = vmatpush.msra.mxu0 %v43
    %71 = vmatpush.msra.mxu0 %v42
    %72 = vmatpush.msra.mxu0 %v41
    %73 = vmatpush.msra.mxu0 %v40
    %74 = vmatmul.f32.gmra.mxu0 %v56
    %v75 = vpop.f32.mrf.mxu0
    %v76 = vadd.f32 %v52, %v75
    %77 = vdwg.mxu0
    %v78 = vmax.f32 %v76, 0.0
    %v79 = vld [vmem:[%s3] sm:$0xff]
    %v80 = vld [vmem:[%s3 + $0x8] sm:$0xff]
    %v81 = vld [vmem:[%s3 + $0x10] sm:$0xff]
    %v82 = vld [vmem:[%s3 + $0x18] sm:$0xff]
    %v83 = vld [vmem:[%s4] sm:$0x1]
    %v85 = vperm.slane %v83, 0
    %vm87 = vcmask 261120
    %v89 = vsel %vm87, %v78, 0
    %91 = vmatpush.msra.mxu0 0.0
    %92 = vmatpush.msra.mxu0 0.0
    %93 = vmatpush.msra.mxu0 0.0
    %94 = vmatpush.msra.mxu0 0.0
    %95 = vmatpush.msra.mxu0 0.0
    %96 = vmatpush.msra.mxu0 0.0
    %97 = vmatpush.msra.mxu0 0.0
    %98 = vmatpush.msra.mxu0 0.0
    %99 = vmatpush.msra.mxu0 0.0
    %100 = vmatpush.msra.mxu0 0.0
    %101 = vmatpush.msra.mxu0 0.0
    %102 = vmatpush.msra.mxu0 0.0
    %103 = vmatpush.msra.mxu0 %v82
    %104 = vmatpush.msra.mxu0 %v81
    %105 = vmatpush.msra.mxu0 %v80
    %106 = vmatpush.msra.mxu0 %v79
    %107 = vmatmul.f32.gmra.mxu0 %v89
    %v108 = vpop.f32.mrf.mxu0
    %v109 = vadd.f32 %v85, %v108
    %110 = vdwg.mxu0
    %v111 = vmax.f32 %v109, 0.0
    %v112 = vld [vmem:[%s5] sm:$0xff]
    %v113 = vld [vmem:[%s5 + $0x8] sm:$0xff]
    %v114 = vld [vmem:[%s6] sm:$0x1]
    %v116 = vperm.slane %v114, 0
    %vm118 = vcmask 130048
    %v120 = vsel %vm118, %v111, 0
    %122 = vmatpush.msra.mxu0 0.0
    %123 = vmatpush.msra.mxu0 0.0
    %124 = vmatpush.msra.mxu0 0.0
    %125 = vmatpush.msra.mxu0 0.0
    %126 = vmatpush.msra.mxu0 0.0
    %127 = vmatpush.msra.mxu0 0.0
    %128 = vmatpush.msra.mxu0 0.0
    %129 = vmatpush.msra.mxu0 0.0
    %130 = vmatpush.msra.mxu0 0.0
    %131 = vmatpush.msra.mxu0 0.0
    %132 = vmatpush.msra.mxu0 0.0
    %133 = vmatpush.msra.mxu0 0.0
    %134 = vmatpush.msra.mxu0 0.0
    %135 = vmatpush.msra.mxu0 0.0
    %136 = vmatpush.msra.mxu0 %v113
    %137 = vmatpush.msra.mxu0 %v112
    %138 = vmatmul.f32.gmra.mxu0 %v120
    %v139 = vpop.f32.mrf.mxu0
    %v140 = vadd.f32 %v116, %v139
    %141 = vdwg.mxu0
    %v142 = vmul.f32 %v140, 0.5
    %v143 = vmul.f32 %v142, 1.442695
    %v144 = vpow.pop %v143
    %146 = vrot.lane.b32.xlu0 %v144, 64
    %v147 = vpop.permute.xlu0 %146
    %v149 = vmul.f32 %v39, %v147
    %151 = vrot.lane.b32.xlu0 %v149, 48
    %v152 = vpop.permute.xlu0 %151
    %v154 = vadd.f32 %v140, %v152
    %v155 = vld [vmem:[%s7] sm:$0xff]
    %v156 = vld [vmem:[%s7 + $0x8] sm:$0xff]
    %v157 = vld [vmem:[%s8] sm:$0x1]
    %v159 = vperm.slane %v157, 0
    %v162 = vsel %vm118, %v154, 0
    %164 = vmatpush.msra.mxu0 0.0
    %165 = vmatpush.msra.mxu0 0.0
    %166 = vmatpush.msra.mxu0 0.0
    %167 = vmatpush.msra.mxu0 0.0
    %168 = vmatpush.msra.mxu0 0.0
    %169 = vmatpush.msra.mxu0 0.0
    %170 = vmatpush.msra.mxu0 0.0
    %171 = vmatpush.msra.mxu0 0.0
    %172 = vmatpush.msra.mxu0 0.0
    %173 = vmatpush.msra.mxu0 0.0
    %174 = vmatpush.msra.mxu0 0.0
    %175 = vmatpush.msra.mxu0 0.0
    %176 = vmatpush.msra.mxu0 0.0
    %177 = vmatpush.msra.mxu0 0.0
    %178 = vmatpush.msra.mxu0 %v156
    %179 = vmatpush.msra.mxu0 %v155
    %180 = vmatmul.f32.gmra.mxu0 %v162
    %v181 = vpop.f32.mrf.mxu0
    %v182 = vadd.f32 %v159, %v181
    %183 = vdwg.mxu0
    %v184 = vmax.f32 %v182, 0.0
    %v185 = vld [vmem:[%s9] sm:$0xff]
    %v186 = vld [vmem:[%s9 + $0x8] sm:$0xff]
    %v187 = vld [vmem:[%s9 + $0x10] sm:$0xff]
    %v188 = vld [vmem:[%s9 + $0x18] sm:$0xff]
    %v189 = vld [vmem:[%s10] sm:$0x1]
    %v191 = vperm.slane %v189, 0
    %v194 = vsel %vm87, %v184, 0
    %196 = vmatpush.msra.mxu0 0.0
    %197 = vmatpush.msra.mxu0 0.0
    %198 = vmatpush.msra.mxu0 0.0
    %199 = vmatpush.msra.mxu0 0.0
    %200 = vmatpush.msra.mxu0 0.0
    %201 = vmatpush.msra.mxu0 0.0
    %202 = vmatpush.msra.mxu0 0.0
    %203 = vmatpush.msra.mxu0 0.0
    %204 = vmatpush.msra.mxu0 0.0
    %205 = vmatpush.msra.mxu0 0.0
    %206 = vmatpush.msra.mxu0 0.0
    %207 = vmatpush.msra.mxu0 0.0
    %208 = vmatpush.msra.mxu0 %v188
    %209 = vmatpush.msra.mxu0 %v187
    %210 = vmatpush.msra.mxu0 %v186
    %211 = vmatpush.msra.mxu0 %v185
    %212 = vmatmul.f32.gmra.mxu0 %v194
    %v213 = vpop.f32.mrf.mxu0
    %v214 = vadd.f32 %v191, %v213
    %215 = vdwg.mxu0
    %v216 = vxor.u32 %v214, 2147483648
    %v217 = vmul.f32 %v216, 1.442695
    %v218 = vpow.pop %v217
    %v219 = vadd.f32 %v218, 1.0
    %v220 = vrcp.pop %v219
    %v221 = vmul.f32 %v219, %v220
    %v222 = vsub.f32 1.0, %v221
    %v223 = vmul.f32 %v220, %v222
    %v224 = vadd.f32 %v220, %v223
    %vm225 = vweird.f32 %v219
    %vm226 = vweird.f32 %v220
    %vm227 = vmor %vm225, %vm226
    %v228 = vsel %vm227, %v220, %v224
    %v229 = vand.u32 2147483647, %v219
    %vm230 = vcmp.eq.f32.partialorder %v229, 8.507059e+37
    %v231 = vand.u32 %v219, 2147483648
    %v232 = vor.u32 1.1754944e-38, %v231
    %v233 = vsel %vm230, %v232, %v228
    %v234 = vmul.f32 1.0, %v233
    %235 = vst.msk [vmem:[#allocation2] sm:$0xff] %vm54, %v234
    %236 = vrot.lane.b32.xlu0 %v111, 80
    %v237 = vpop.permute.xlu0 %236
    %vm239 = vcmask 786048
    %240 = vst.msk [vmem:[#allocation2] sm:$0xff] %vm239, %v237
    %242 = vrot.lane.b32.xlu0 %v140, 96
    %v243 = vpop.permute.xlu0 %242
    %vm245 = vcmask 917248
    %246 = vst.msk [vmem:[#allocation2] sm:$0xff] %vm245, %v243
    %vm247 = vcmask 1048448
    %248 = vst.msk [vmem:[#allocation2] sm:$0xff] %vm247, %v243
    // Predicated region
    $region46: #{tpu_custom_call.1} parent=1 // pred_check
      _
    $region47: #{tpu_custom_call.1} parent=1 // pred_check_branch
      %250 = sbr.rel (0) target = $region49
    $region48: #{tpu_custom_call.1} parent=1 // pred_region
      %252 = vsyncadd [#allocation3], 0
      %s254 = sshll.u32 [#allocation2], 4
      %s255 = int_to_ptr.vmem [resolvable:$true] %s254
      %s256 = sshll.u32 %s11, 4
      %s257 = int_to_ptr.hbm [resolvable:$true] %s256
      %259 = dma.vmem_to_hbm [thread:$0]  %s255, 128, %s257, [#allocation3]
    $region49: #{tpu_custom_call.1} parent=1 // pred_fallthru
      _
    // Predicated region
    $region50: #{tpu_custom_call.1} parent=1 // pred_check
      _
    $region51: #{tpu_custom_call.1} parent=1 // pred_check_branch
      %261 = sbr.rel (0) target = $region53
    $region52: #{tpu_custom_call.1} parent=1 // pred_region
      %263 = dma.done [#allocation3], 128
    $region53: #{tpu_custom_call.1} parent=1 // pred_fallthru
      _
    %264 = vsyncpa [#allocation3], 1

</llo_original>
